<compile_context>
chip_gen: v6e
topology: v6e:2x2x1
jax: 0.10.0
libtpu: 0.0.40
codegen_flags: <defaults>
</compile_context>

<pallas_src>
import functools

import jax
import jax.numpy as jnp
from jax.experimental import pallas as pl
from jax.experimental.pallas import tpu as pltpu


NEG_SLOPE = 0.01  # nn.LeakyReLU default negative_slope


def _leaky_relu(x):
    # valid for 0 <= NEG_SLOPE < 1: max(x, a*x) == leaky_relu(x)
    return jnp.maximum(x, NEG_SLOPE * x)


def _mlp_kernel(x_ref, w1_ref, b1_ref, w2_ref, b2_ref, w3_ref, b3_ref, o_ref,
                *, compute_dtype):
    # Cast x to the MXU compute dtype in-kernel (VPU op, hidden under the
    # pipeline); x stays f32 in HBM and is streamed exactly once.
    x = x_ref[...].astype(compute_dtype)

    # layer 1: Linear(in_dim -> hidden) + LeakyReLU   (dropout = identity, eval)
    h = jnp.dot(x, w1_ref[...], preferred_element_type=jnp.float32)
    h = _leaky_relu(h + b1_ref[...])

    # layer 2: Linear(hidden -> hidden) + LeakyReLU   (dropout = identity, eval)
    h = jnp.dot(h.astype(compute_dtype), w2_ref[...],
                preferred_element_type=jnp.float32)
    h = _leaky_relu(h + b2_ref[...])

    # last_linear: Linear(hidden -> out_dim) + sigmoid  (last_sigmoid=True)
    z = jnp.dot(h.astype(compute_dtype), w3_ref[...],
                preferred_element_type=jnp.float32)
    o_ref[...] = jax.nn.sigmoid(z + b3_ref[...]).astype(o_ref.dtype)


def _round_up(n, m):
    return ((n + m - 1) // m) * m


@functools.partial(jax.jit, static_argnames=("tile_b", "use_bf16"))
def mlp_forward(x, params, *, tile_b=2048, use_bf16=True):
    """x: [B, in_dim] float32.  params: dict of (w1,b1,w2,b2,w3,b3)."""
    w1, b1, w2, b2, w3, b3 = (params[k] for k in ("w1", "b1", "w2", "b2", "w3", "b3"))
    B, in_dim = x.shape
    hidden = w1.shape[1]
    out_dim = w3.shape[1]

    compute_dtype = jnp.bfloat16 if use_bf16 else jnp.float32

    # Tiny weights: pre-cast once in the wrapper (~0.2 MiB in bf16).
    # Biases and all elementwise math stay f32.
    w1 = w1.astype(compute_dtype)
    w2 = w2.astype(compute_dtype)
    w3 = w3.astype(compute_dtype)
    b1r = b1.reshape(1, hidden).astype(jnp.float32)
    b2r = b2.reshape(1, hidden).astype(jnp.float32)
    b3r = b3.reshape(1, out_dim).astype(jnp.float32)

    # Batch tile selection (no padding copy; Pallas masks the ragged last
    # block). Keep the block a multiple of 8 sublanes (or == B for tiny B),
    # and cap it at ~ceil(B/2) so there are >= 2 tiles for v7x's two cores.
    if B <= 8:
        tb = B                                   # block dim == array dim
    else:
        half = _round_up((B + 1) // 2, 8)
        tb = max(8, min(tile_b, half))

    grid = (pl.cdiv(B, tb),)

    itemsize = 2 if use_bf16 else 4
    flops = 2 * B * (in_dim * hidden + hidden * hidden + hidden * out_dim)
    bytes_accessed = (
        4 * B * in_dim                                                     # x (f32)
        + itemsize * (in_dim * hidden + hidden * hidden + hidden * out_dim)  # weights
        + 4 * (2 * hidden + out_dim)                                       # biases
        + 4 * B * out_dim                                                  # output
    )

    kernel = functools.partial(_mlp_kernel, compute_dtype=compute_dtype)

    out = pl.pallas_call(
        kernel,
        out_shape=jax.ShapeDtypeStruct((B, out_dim), jnp.float32),
        grid=grid,
        in_specs=[
            # streamed per batch tile (f32, cast to bf16 inside the kernel)
            pl.BlockSpec((tb, in_dim), lambda i: (i, 0)),
            # weights / biases: resident across all batch tiles (no re-DMA)
            pl.BlockSpec((in_dim, hidden), lambda i: (0, 0)),
            pl.BlockSpec((1, hidden), lambda i: (0, 0)),
            pl.BlockSpec((hidden, hidden), lambda i: (0, 0)),
            pl.BlockSpec((1, hidden), lambda i: (0, 0)),
            pl.BlockSpec((hidden, out_dim), lambda i: (0, 0)),
            pl.BlockSpec((1, out_dim), lambda i: (0, 0)),
        ],
        out_specs=pl.BlockSpec((tb, out_dim), lambda i: (i, 0)),
        compiler_params=pltpu.CompilerParams(
            dimension_semantics=("parallel",),
        ),
        cost_estimate=pl.CostEstimate(
            flops=flops,
            transcendentals=B * out_dim,
            bytes_accessed=bytes_accessed,
        ),
    )(x, w1, b1r, w2, b2r, w3, b3r)

    return out


def init_params(key, in_dim=118, hidden_dim=256, out_dim=1):
    """Deterministic synthetic parameters (PyTorch Linear shapes, stored transposed)."""
    k1, k2, k3, k4, k5, k6 = jax.random.split(key, 6)
    s1 = 1.0 / jnp.sqrt(in_dim)
    s2 = 1.0 / jnp.sqrt(hidden_dim)
    return {
        "w1": jax.random.uniform(k1, (in_dim, hidden_dim), jnp.float32, -s1, s1),
        "b1": jax.random.uniform(k2, (hidden_dim,), jnp.float32, -s1, s1),
        "w2": jax.random.uniform(k3, (hidden_dim, hidden_dim), jnp.float32, -s2, s2),
        "b2": jax.random.uniform(k4, (hidden_dim,), jnp.float32, -s2, s2),
        "w3": jax.random.uniform(k5, (hidden_dim, out_dim), jnp.float32, -s2, s2),
        "b3": jax.random.uniform(k6, (out_dim,), jnp.float32, -s2, s2),
    }


def mlp_reference(x, p):
    h = _leaky_relu(x @ p["w1"] + p["b1"])
    h = _leaky_relu(h @ p["w2"] + p["b2"])
    return jax.nn.sigmoid(h @ p["w3"] + p["b3"])


if __name__ == "__main__":
    key = jax.random.PRNGKey(0)
    kp, kx = jax.random.split(key)
    in_dim, hidden_dim, out_dim, batch = 118, 256, 1, 8

    params = init_params(kp, in_dim, hidden_dim, out_dim)
    x = jax.random.normal(kx, (batch, in_dim), jnp.float32)

    y_ref = mlp_reference(x, params)

    # Default (fast) path: bf16 MXU inputs, f32 accumulate / elementwise math.
    y_bf16 = jax.block_until_ready(mlp_forward(x, params))
    assert y_bf16.shape == (batch, out_dim), y_bf16.shape
    assert jnp.allclose(y_bf16, y_ref, atol=5e-2, rtol=5e-2), (
        float(jnp.max(jnp.abs(y_bf16 - y_ref)))
    )

    # Strict f32 path for tight numerical verification.
    y_f32 = jax.block_until_ready(mlp_forward(x, params, use_bf16=False))
    assert y_f32.shape == (batch, out_dim), y_f32.shape
    assert jnp.allclose(y_f32, y_ref, atol=1e-5, rtol=1e-5), (
        float(jnp.max(jnp.abs(y_f32 - y_ref)))
    )

    print("KERNEL_OK")
</pallas_src>

<mosaic_0001>
module attributes {stable_mosaic.version = 11 : i64} {
  func.func @_mlp_kernel(%arg0: i32, %arg1: memref<8x118xf32, #tpu.memory_space<vmem>>, %arg2: memref<118x256xbf16, #tpu.memory_space<vmem>>, %arg3: memref<1x256xf32, #tpu.memory_space<vmem>>, %arg4: memref<256x256xbf16, #tpu.memory_space<vmem>>, %arg5: memref<1x256xf32, #tpu.memory_space<vmem>>, %arg6: memref<256x1xbf16, #tpu.memory_space<vmem>>, %arg7: memref<1x1xf32, #tpu.memory_space<vmem>>, %arg8: memref<8x1xf32, #tpu.memory_space<vmem>>) attributes {dimension_semantics = [#tpu.dimension_semantics<parallel>], iteration_bounds = array<i64: 1>, scalar_prefetch = 0 : i64, scratch_operands = 0 : i64, tpu.core_type = #tpu.core_type<tc>, window_params = [{transform_indices = @transform_0, window_bounds = array<i64: 8, 118>}, {pipeline_mode = #tpu.pipeline_mode<synchronous>, transform_indices = @transform_1, window_bounds = array<i64: 118, 256>}, {pipeline_mode = #tpu.pipeline_mode<synchronous>, transform_indices = @transform_2, window_bounds = array<i64: 1, 256>}, {pipeline_mode = #tpu.pipeline_mode<synchronous>, transform_indices = @transform_3, window_bounds = array<i64: 256, 256>}, {pipeline_mode = #tpu.pipeline_mode<synchronous>, transform_indices = @transform_4, window_bounds = array<i64: 1, 256>}, {pipeline_mode = #tpu.pipeline_mode<synchronous>, transform_indices = @transform_5, window_bounds = array<i64: 256, 1>}, {pipeline_mode = #tpu.pipeline_mode<synchronous>, transform_indices = @transform_6, window_bounds = array<i64: 1, 1>}, {transform_indices = @transform_7, window_bounds = array<i64: 8, 1>}]} {
    %c0 = arith.constant 0 : index
    %c0_0 = arith.constant 0 : index
    %0 = vector.load %arg1[%c0, %c0_0] : memref<8x118xf32, #tpu.memory_space<vmem>>, vector<8x118xf32>
    %1 = arith.truncf %0 : vector<8x118xf32> to vector<8x118xbf16>
    %c0_1 = arith.constant 0 : index
    %c0_2 = arith.constant 0 : index
    %2 = vector.load %arg2[%c0_1, %c0_2] : memref<118x256xbf16, #tpu.memory_space<vmem>>, vector<118x256xbf16>
    %cst = arith.constant dense<0.000000e+00> : vector<8x256xf32>
    %3 = tpu.matmul %1, %2, %cst {dimension_numbers = #tpu.dot_dimension_numbers<[1], [0], [0], [1], [0, 0, 1, 1], [], []>} : vector<8x118xbf16>, vector<118x256xbf16>, vector<8x256xf32> -> vector<8x256xf32>
    %c0_3 = arith.constant 0 : index
    %c0_4 = arith.constant 0 : index
    %4 = vector.load %arg3[%c0_3, %c0_4] : memref<1x256xf32, #tpu.memory_space<vmem>>, vector<1x256xf32>
    %5 = vector.broadcast %4 : vector<1x256xf32> to vector<8x256xf32>
    %6 = arith.addf %3, %5 : vector<8x256xf32>
    %cst_5 = arith.constant 0.00999999977 : f32
    %7 = vector.broadcast %cst_5 : f32 to vector<8x256xf32>
    %8 = arith.mulf %7, %6 : vector<8x256xf32>
    %9 = arith.maximumf %6, %8 : vector<8x256xf32>
    %10 = arith.truncf %9 : vector<8x256xf32> to vector<8x256xbf16>
    %c0_6 = arith.constant 0 : index
    %c0_7 = arith.constant 0 : index
    %11 = vector.load %arg4[%c0_6, %c0_7] : memref<256x256xbf16, #tpu.memory_space<vmem>>, vector<256x256xbf16>
    %cst_8 = arith.constant dense<0.000000e+00> : vector<8x256xf32>
    %12 = tpu.matmul %10, %11, %cst_8 {dimension_numbers = #tpu.dot_dimension_numbers<[1], [0], [0], [1], [0, 0, 1, 1], [], []>} : vector<8x256xbf16>, vector<256x256xbf16>, vector<8x256xf32> -> vector<8x256xf32>
    %c0_9 = arith.constant 0 : index
    %c0_10 = arith.constant 0 : index
    %13 = vector.load %arg5[%c0_9, %c0_10] : memref<1x256xf32, #tpu.memory_space<vmem>>, vector<1x256xf32>
    %14 = vector.broadcast %13 : vector<1x256xf32> to vector<8x256xf32>
    %15 = arith.addf %12, %14 : vector<8x256xf32>
    %cst_11 = arith.constant 0.00999999977 : f32
    %16 = vector.broadcast %cst_11 : f32 to vector<8x256xf32>
    %17 = arith.mulf %16, %15 : vector<8x256xf32>
    %18 = arith.maximumf %15, %17 : vector<8x256xf32>
    %19 = arith.truncf %18 : vector<8x256xf32> to vector<8x256xbf16>
    %c0_12 = arith.constant 0 : index
    %c0_13 = arith.constant 0 : index
    %20 = vector.load %arg6[%c0_12, %c0_13] : memref<256x1xbf16, #tpu.memory_space<vmem>>, vector<256x1xbf16>
    %cst_14 = arith.constant dense<0.000000e+00> : vector<8x1xf32>
    %21 = tpu.matmul %19, %20, %cst_14 {dimension_numbers = #tpu.dot_dimension_numbers<[1], [0], [0], [1], [0, 0, 1, 1], [], []>} : vector<8x256xbf16>, vector<256x1xbf16>, vector<8x1xf32> -> vector<8x1xf32>
    %c0_15 = arith.constant 0 : index
    %c0_16 = arith.constant 0 : index
    %22 = vector.load %arg7[%c0_15, %c0_16] : memref<1x1xf32, #tpu.memory_space<vmem>>, vector<1x1xf32>
    %23 = vector.broadcast %22 : vector<1x1xf32> to vector<8x1xf32>
    %24 = arith.addf %21, %23 : vector<8x1xf32>
    %25 = arith.negf %24 : vector<8x1xf32>
    %26 = math.exp %25 : vector<8x1xf32>
    %cst_17 = arith.constant 1.000000e+00 : f32
    %27 = vector.broadcast %cst_17 : f32 to vector<8x1xf32>
    %28 = arith.addf %27, %26 : vector<8x1xf32>
    %29 = arith.divf %27, %28 : vector<8x1xf32>
    %c0_18 = arith.constant 0 : index
    %c0_19 = arith.constant 0 : index
    %30 = vector.load %arg8[%c0_18, %c0_19] : memref<8x1xf32, #tpu.memory_space<vmem>>, vector<8x1xf32>
    tpu.vector_store %arg8[%c0_18, %c0_19], %29 {strides = array<i32>} : memref<8x1xf32, #tpu.memory_space<vmem>>, vector<8x1xf32>,
    return
  }
  func.func @transform_0(%arg0: i32) -> (i32, i32) {
    %c0_i32 = arith.constant 0 : i32
    %c0_i32_0 = arith.constant 0 : i32
    return %arg0, %c0_i32 : i32, i32
  }
  func.func @transform_1(%arg0: i32) -> (i32, i32) {
    %c0_i32 = arith.constant 0 : i32
    %c0_i32_0 = arith.constant 0 : i32
    %c0_i32_1 = arith.constant 0 : i32
    return %c0_i32, %c0_i32_0 : i32, i32
  }
  func.func @transform_2(%arg0: i32) -> (i32, i32) {
    %c0_i32 = arith.constant 0 : i32
    %c0_i32_0 = arith.constant 0 : i32
    %c0_i32_1 = arith.constant 0 : i32
    return %c0_i32, %c0_i32_0 : i32, i32
  }
  func.func @transform_3(%arg0: i32) -> (i32, i32) {
    %c0_i32 = arith.constant 0 : i32
    %c0_i32_0 = arith.constant 0 : i32
    %c0_i32_1 = arith.constant 0 : i32
    return %c0_i32, %c0_i32_0 : i32, i32
  }
  func.func @transform_4(%arg0: i32) -> (i32, i32) {
    %c0_i32 = arith.constant 0 : i32
    %c0_i32_0 = arith.constant 0 : i32
    %c0_i32_1 = arith.constant 0 : i32
    return %c0_i32, %c0_i32_0 : i32, i32
  }
  func.func @transform_5(%arg0: i32) -> (i32, i32) {
    %c0_i32 = arith.constant 0 : i32
    %c0_i32_0 = arith.constant 0 : i32
    %c0_i32_1 = arith.constant 0 : i32
    return %c0_i32, %c0_i32_0 : i32, i32
  }
  func.func @transform_6(%arg0: i32) -> (i32, i32) {
    %c0_i32 = arith.constant 0 : i32
    %c0_i32_0 = arith.constant 0 : i32
    %c0_i32_1 = arith.constant 0 : i32
    return %c0_i32, %c0_i32_0 : i32, i32
  }
  func.func @transform_7(%arg0: i32) -> (i32, i32) {
    %c0_i32 = arith.constant 0 : i32
    %c0_i32_0 = arith.constant 0 : i32
    return %arg0, %c0_i32 : i32, i32
  }
}

</mosaic_0001>

<llo_original>
// kernel: mlp_forward.1
$region0: #{mlp_forward.1}
  #allocation0 [shape = 'u32[]', space=smem, size = 0x4, offset = 0x4, fixed_abs, tag = 'smem constant byte address 0x4 - core index']
  #allocation1 [shape = 'u32[144,128]{1,0:T(1,128)}', space=vmem, size = 0x12000, scoped, tag = 'internal scratch']
  #allocation2 [shape = 'f32[1,1]{1,0:T(1,128)S(1)}', space=vmem, size = 0x200, scoped, tag = 'scoped memory for mlp_forward.1']
  %s0 = inlined_call_operand.vmem [shape: f32[8,118], index: 0, kind: input, shape index: {}]
  %s1 = inlined_call_operand.vmem [shape: bf16[118,256], index: 1, kind: input, shape index: {}]
  %s2 = inlined_call_operand.vmem [shape: f32[1,256], index: 2, kind: input, shape index: {}]
  %s3 = inlined_call_operand.vmem [shape: bf16[256,256], index: 3, kind: input, shape index: {}]
  %s4 = inlined_call_operand.vmem [shape: f32[1,256], index: 4, kind: input, shape index: {}]
  %s5 = inlined_call_operand.vmem [shape: bf16[256,1], index: 5, kind: input, shape index: {}]
  %s6 = inlined_call_operand.<no memory space> [shape: f32[1,1], index: 6, kind: input, shape index: {}]
  %s7 = inlined_call_operand.vmem [shape: f32[8,1], index: 7, kind: output, shape index: {}]
  %s8 = sld [smem:[#allocation0]]
  $region38: #{mlp_forward.1} parent=0
    _
  %s10 = ssub.s32 1, %s8
  %s11 = scalar_select 0, %s10, %s8
  %v12 = vstv %s6
  %13 = vst [vmem:[#allocation2] sm:$0x1] %v12
  // Predicated region
  $region2: #{mlp_forward.1} parent=0 // pred_check
    _
  $region3: #{mlp_forward.1} parent=0 // pred_check_branch
    %15 = sbr.rel (0) target = $region5
  $region4: #{mlp_forward.1} parent=0 // pred_region
    _
  $region5: #{mlp_forward.1} parent=0 // pred_fallthru
    _
  // Predicated region
  $region6: #{mlp_forward.1} parent=0 // pred_check
    _
  $region7: #{mlp_forward.1} parent=0 // pred_check_branch
    %17 = sbr.rel (0) target = $region9
  $region8: #{mlp_forward.1} parent=0 // pred_region
    _
  $region9: #{mlp_forward.1} parent=0 // pred_fallthru
    _
  // Predicated region
  $region10: #{mlp_forward.1} parent=0 // pred_check
    _
  $region11: #{mlp_forward.1} parent=0 // pred_check_branch
    %19 = sbr.rel (0) target = $region13
  $region12: #{mlp_forward.1} parent=0 // pred_region
    _
  $region13: #{mlp_forward.1} parent=0 // pred_fallthru
    _
  // Predicated region
  $region14: #{mlp_forward.1} parent=0 // pred_check
    _
  $region15: #{mlp_forward.1} parent=0 // pred_check_branch
    %21 = sbr.rel (0) target = $region17
  $region16: #{mlp_forward.1} parent=0 // pred_region
    _
  $region17: #{mlp_forward.1} parent=0 // pred_fallthru
    _
  // Predicated region
  $region18: #{mlp_forward.1} parent=0 // pred_check
    _
  $region19: #{mlp_forward.1} parent=0 // pred_check_branch
    %23 = sbr.rel (0) target = $region21
  $region20: #{mlp_forward.1} parent=0 // pred_region
    _
  $region21: #{mlp_forward.1} parent=0 // pred_fallthru
    _
  // Predicated region
  $region22: #{mlp_forward.1} parent=0 // pred_check
    _
  $region23: #{mlp_forward.1} parent=0 // pred_check_branch
    %25 = sbr.rel (0) target = $region25
  $region24: #{mlp_forward.1} parent=0 // pred_region
    _
  $region25: #{mlp_forward.1} parent=0 // pred_fallthru
    _
  // Predicated region
  $region26: #{mlp_forward.1} parent=0 // pred_check
    _
  $region27: #{mlp_forward.1} parent=0 // pred_check_branch
    %27 = sbr.rel (0) target = $region29
  $region28: #{mlp_forward.1} parent=0 // pred_region
    _
  $region29: #{mlp_forward.1} parent=0 // pred_fallthru
    _
  %v29 = vld [vmem:[%s0] sm:$0xff]
  %v30 = vpack.c.bf16 %v29, %v29
  %v31 = vld [vmem:[%s1] sm:$0xff]
  %v32 = vld [vmem:[%s1 + $0x8] sm:$0xff]
  %v33 = vld [vmem:[%s1 + $0x10] sm:$0xff]
  %v34 = vld [vmem:[%s1 + $0x18] sm:$0xff]
  %v35 = vld [vmem:[%s1 + $0x20] sm:$0xff]
  %v36 = vld [vmem:[%s1 + $0x28] sm:$0xff]
  %v37 = vld [vmem:[%s1 + $0x30] sm:$0xff]
  %v38 = vld [vmem:[%s1 + $0x38] sm:$0xff]
  %v39 = vld [vmem:[%s1 + $0x40] sm:$0xff]
  %v40 = vld [vmem:[%s1 + $0x48] sm:$0xff]
  %v41 = vld [vmem:[%s1 + $0x50] sm:$0xff]
  %v42 = vld [vmem:[%s1 + $0x58] sm:$0xff]
  %v43 = vld [vmem:[%s1 + $0x60] sm:$0xff]
  %v44 = vld [vmem:[%s1 + $0x68] sm:$0xff]
  %v45 = vld [vmem:[%s1 + $0x70] sm:$0x77]
  %v46 = vld [vmem:[%s2] sm:$0x3]
  %v48 = vlaneseq
  %v49 = vshrl.u32 %v48, 7
  %v50 = vsub.s32 0, %v49
  %v51 = vrot.slane %v46, %v50
  %v52 = vlaneseq
  %v53 = vshrl.u32 %v52, 7
  %v54 = vsub.s32 1, %v53
  %v55 = vrot.slane %v46, %v54
  %v73 = vunpack.c.l.b16 %v31
  %v74 = vunpack.c.h.b16 %v31
  %v75 = vunpack.c.l.b16 %v32
  %v76 = vunpack.c.h.b16 %v32
  %v77 = vunpack.c.l.b16 %v33
  %v78 = vunpack.c.h.b16 %v33
  %v79 = vunpack.c.l.b16 %v34
  %v80 = vunpack.c.h.b16 %v34
  %v81 = vunpack.c.l.b16 %v35
  %v82 = vunpack.c.h.b16 %v35
  %v83 = vunpack.c.l.b16 %v36
  %v84 = vunpack.c.h.b16 %v36
  %v85 = vunpack.c.l.b16 %v37
  %v86 = vunpack.c.h.b16 %v37
  %v87 = vunpack.c.l.b16 %v38
  %v88 = vunpack.c.h.b16 %v38
  %v89 = vunpack.c.l.b16 %v39
  %v90 = vunpack.c.h.b16 %v39
  %v91 = vunpack.c.l.b16 %v40
  %v92 = vunpack.c.h.b16 %v40
  %v93 = vunpack.c.l.b16 %v41
  %v94 = vunpack.c.h.b16 %v41
  %v95 = vunpack.c.l.b16 %v42
  %v96 = vunpack.c.h.b16 %v42
  %v97 = vunpack.c.l.b16 %v43
  %v98 = vunpack.c.h.b16 %v43
  %v99 = vunpack.c.l.b16 %v44
  %v100 = vunpack.c.h.b16 %v44
  %v101 = vunpack.c.l.b16 %v45
  %v102 = vunpack.c.h.b16 %v45
  %v103 = vpack.c.b16 %v75, %v73
  %v104 = vpack.c.b16 %v76, %v74
  %v105 = vpack.c.b16 %v79, %v77
  %v106 = vpack.c.b16 %v80, %v78
  %v107 = vpack.c.b16 %v83, %v81
  %v108 = vpack.c.b16 %v84, %v82
  %v109 = vpack.c.b16 %v87, %v85
  %v110 = vpack.c.b16 %v88, %v86
  %v111 = vpack.c.b16 %v91, %v89
  %v112 = vpack.c.b16 %v92, %v90
  %v113 = vpack.c.b16 %v95, %v93
  %v114 = vpack.c.b16 %v96, %v94
  %v115 = vpack.c.b16 %v99, %v97
  %v116 = vpack.c.b16 %v100, %v98
  %v117 = vpack.c.b16 %v101, %v101
  %v118 = vpack.c.b16 %v102, %v102
  %vm133 = vcmask 965632
  %v135 = vsel %vm133, %v30, 0
  %vm137 = vcmask 1042432
  %v139 = vsel %vm137, %v117, 0
  %v142 = vsel %vm137, %v118, 0
  %144 = vmatprep.subr.bf16.mxu0 %v142
  %145 = vmatpush1.bf16.msra.mxu0 %v139
  %146 = vmatprep.subr.bf16.mxu0 %v116
  %147 = vmatpush1.bf16.msra.mxu0 %v115
  %148 = vmatprep.subr.bf16.mxu0 %v114
  %149 = vmatpush1.bf16.msra.mxu0 %v113
  %150 = vmatprep.subr.bf16.mxu0 %v112
  %151 = vmatpush1.bf16.msra.mxu0 %v111
  %152 = vmatprep.subr.bf16.mxu0 %v110
  %153 = vmatpush1.bf16.msra.mxu0 %v109
  %154 = vmatprep.subr.bf16.mxu0 %v108
  %155 = vmatpush1.bf16.msra.mxu0 %v107
  %156 = vmatprep.subr.bf16.mxu0 %v106
  %157 = vmatpush1.bf16.msra.mxu0 %v105
  %158 = vmatprep.subr.bf16.mxu0 %v104
  %159 = vmatpush1.bf16.msra.mxu0 %v103
  %160 = vmatprep.subr.bf16.mxu0 0
  %161 = vmatpush2.bf16.msra.mxu0 0
  %162 = vmatprep.subr.bf16.mxu0 0
  %163 = vmatpush2.bf16.msra.mxu0 0
  %164 = vmatprep.subr.bf16.mxu0 0
  %165 = vmatpush2.bf16.msra.mxu0 0
  %166 = vmatprep.subr.bf16.mxu0 0
  %167 = vmatpush2.bf16.msra.mxu0 0
  %168 = vmatprep.subr.bf16.mxu0 0
  %169 = vmatpush2.bf16.msra.mxu0 0
  %170 = vmatprep.subr.bf16.mxu0 0
  %171 = vmatpush2.bf16.msra.mxu0 0
  %172 = vmatprep.subr.bf16.mxu0 0
  %173 = vmatpush2.bf16.msra.mxu0 0
  %174 = vmatprep.subr.bf16.mxu0 0
  %175 = vmatpush2.bf16.msra.mxu0 0
  %176 = vmatprep.mubr.bf16.mxu0 0
  %177 = vmatmul.mubr.bf16.gmra.mxu0 %v135
  %v178 = vpop.f32.mrf.mxu0
  %v179 = vadd.f32 %v51, %v178
  %v180 = vpop.f32.mrf.mxu0
  %v181 = vadd.f32 %v55, %v180
  %v182 = vpop.f32.mrf.mxu0
  %v183 = vpop.f32.mrf.mxu0
  %184 = vdwg.mxu0
  %v185 = vmul.f32 %v179, 0.01
  %v186 = vmul.f32 %v181, 0.01
  %v187 = vmax.f32 %v179, %v185
  %v188 = vmax.f32 %v181, %v186
  %v189 = vpack.c.bf16 %v187, %v187
  %v190 = vpack.c.bf16 %v188, %v188
  %v191 = vld [vmem:[%s3] sm:$0xff]
  %v192 = vld [vmem:[%s3 + $0x8] sm:$0xff]
  %v193 = vld [vmem:[%s3 + $0x10] sm:$0xff]
  %v194 = vld [vmem:[%s3 + $0x18] sm:$0xff]
  %v195 = vld [vmem:[%s3 + $0x20] sm:$0xff]
  %v196 = vld [vmem:[%s3 + $0x28] sm:$0xff]
  %v197 = vld [vmem:[%s3 + $0x30] sm:$0xff]
  %v198 = vld [vmem:[%s3 + $0x38] sm:$0xff]
  %v199 = vld [vmem:[%s3 + $0x40] sm:$0xff]
  %v200 = vld [vmem:[%s3 + $0x48] sm:$0xff]
  %v201 = vld [vmem:[%s3 + $0x50] sm:$0xff]
  %v202 = vld [vmem:[%s3 + $0x58] sm:$0xff]
  %v203 = vld [vmem:[%s3 + $0x60] sm:$0xff]
  %v204 = vld [vmem:[%s3 + $0x68] sm:$0xff]
  %v205 = vld [vmem:[%s3 + $0x70] sm:$0xff]
  %v206 = vld [vmem:[%s3 + $0x78] sm:$0xff]
  %v207 = vld [vmem:[%s3 + $0x80] sm:$0xff]
  %v208 = vld [vmem:[%s3 + $0x88] sm:$0xff]
  %v209 = vld [vmem:[%s3 + $0x90] sm:$0xff]
  %v210 = vld [vmem:[%s3 + $0x98] sm:$0xff]
  %v211 = vld [vmem:[%s3 + $0xa0] sm:$0xff]
  %v212 = vld [vmem:[%s3 + $0xa8] sm:$0xff]
  %v213 = vld [vmem:[%s3 + $0xb0] sm:$0xff]
  %v214 = vld [vmem:[%s3 + $0xb8] sm:$0xff]
  %v215 = vld [vmem:[%s3 + $0xc0] sm:$0xff]
  %v216 = vld [vmem:[%s3 + $0xc8] sm:$0xff]
  %v217 = vld [vmem:[%s3 + $0xd0] sm:$0xff]
  %v218 = vld [vmem:[%s3 + $0xd8] sm:$0xff]
  %v219 = vld [vmem:[%s3 + $0xe0] sm:$0xff]
  %v220 = vld [vmem:[%s3 + $0xe8] sm:$0xff]
  %v221 = vld [vmem:[%s3 + $0xf0] sm:$0xff]
  %v222 = vld [vmem:[%s3 + $0xf8] sm:$0xff]
  %v223 = vld [vmem:[%s4] sm:$0x3]
  %v225 = vlaneseq
  %v226 = vshrl.u32 %v225, 7
  %v227 = vsub.s32 0, %v226
  %v228 = vrot.slane %v223, %v227
  %v229 = vlaneseq
  %v230 = vshrl.u32 %v229, 7
  %v231 = vsub.s32 1, %v230
  %v232 = vrot.slane %v223, %v231
  %v267 = vunpack.c.l.b16 %v191
  %v268 = vunpack.c.h.b16 %v191
  %v269 = vunpack.c.l.b16 %v192
  %v270 = vunpack.c.h.b16 %v192
  %v271 = vunpack.c.l.b16 %v193
  %v272 = vunpack.c.h.b16 %v193
  %v273 = vunpack.c.l.b16 %v194
  %v274 = vunpack.c.h.b16 %v194
  %v275 = vunpack.c.l.b16 %v195
  %v276 = vunpack.c.h.b16 %v195
  %v277 = vunpack.c.l.b16 %v196
  %v278 = vunpack.c.h.b16 %v196
  %v279 = vunpack.c.l.b16 %v197
  %v280 = vunpack.c.h.b16 %v197
  %v281 = vunpack.c.l.b16 %v198
  %v282 = vunpack.c.h.b16 %v198
  %v283 = vunpack.c.l.b16 %v199
  %v284 = vunpack.c.h.b16 %v199
  %v285 = vunpack.c.l.b16 %v200
  %v286 = vunpack.c.h.b16 %v200
  %v287 = vunpack.c.l.b16 %v201
  %v288 = vunpack.c.h.b16 %v201
  %v289 = vunpack.c.l.b16 %v202
  %v290 = vunpack.c.h.b16 %v202
  %v291 = vunpack.c.l.b16 %v203
  %v292 = vunpack.c.h.b16 %v203
  %v293 = vunpack.c.l.b16 %v204
  %v294 = vunpack.c.h.b16 %v204
  %v295 = vunpack.c.l.b16 %v205
  %v296 = vunpack.c.h.b16 %v205
  %v297 = vunpack.c.l.b16 %v206
  %v298 = vunpack.c.h.b16 %v206
  %v299 = vunpack.c.l.b16 %v207
  %v300 = vunpack.c.h.b16 %v207
  %v301 = vunpack.c.l.b16 %v208
  %v302 = vunpack.c.h.b16 %v208
  %v303 = vunpack.c.l.b16 %v209
  %v304 = vunpack.c.h.b16 %v209
  %v305 = vunpack.c.l.b16 %v210
  %v306 = vunpack.c.h.b16 %v210
  %v307 = vunpack.c.l.b16 %v211
  %v308 = vunpack.c.h.b16 %v211
  %v309 = vunpack.c.l.b16 %v212
  %v310 = vunpack.c.h.b16 %v212
  %v311 = vunpack.c.l.b16 %v213
  %v312 = vunpack.c.h.b16 %v213
  %v313 = vunpack.c.l.b16 %v214
  %v314 = vunpack.c.h.b16 %v214
  %v315 = vunpack.c.l.b16 %v215
  %v316 = vunpack.c.h.b16 %v215
  %v317 = vunpack.c.l.b16 %v216
  %v318 = vunpack.c.h.b16 %v216
  %v319 = vunpack.c.l.b16 %v217
  %v320 = vunpack.c.h.b16 %v217
  %v321 = vunpack.c.l.b16 %v218
  %v322 = vunpack.c.h.b16 %v218
  %v323 = vunpack.c.l.b16 %v219
  %v324 = vunpack.c.h.b16 %v219
  %v325 = vunpack.c.l.b16 %v220
  %v326 = vunpack.c.h.b16 %v220
  %v327 = vunpack.c.l.b16 %v221
  %v328 = vunpack.c.h.b16 %v221
  %v329 = vunpack.c.l.b16 %v222
  %v330 = vunpack.c.h.b16 %v222
  %v331 = vpack.c.b16 %v269, %v267
  %v332 = vpack.c.b16 %v270, %v268
  %v333 = vpack.c.b16 %v273, %v271
  %v334 = vpack.c.b16 %v274, %v272
  %v335 = vpack.c.b16 %v277, %v275
  %v336 = vpack.c.b16 %v278, %v276
  %v337 = vpack.c.b16 %v281, %v279
  %v338 = vpack.c.b16 %v282, %v280
  %v339 = vpack.c.b16 %v285, %v283
  %v340 = vpack.c.b16 %v286, %v284
  %v341 = vpack.c.b16 %v289, %v287
  %v342 = vpack.c.b16 %v290, %v288
  %v343 = vpack.c.b16 %v293, %v291
  %v344 = vpack.c.b16 %v294, %v292
  %v345 = vpack.c.b16 %v297, %v295
  %v346 = vpack.c.b16 %v298, %v296
  %v347 = vpack.c.b16 %v301, %v299
  %v348 = vpack.c.b16 %v302, %v300
  %v349 = vpack.c.b16 %v305, %v303
  %v350 = vpack.c.b16 %v306, %v304
  %v351 = vpack.c.b16 %v309, %v307
  %v352 = vpack.c.b16 %v310, %v308
  %v353 = vpack.c.b16 %v313, %v311
  %v354 = vpack.c.b16 %v314, %v312
  %v355 = vpack.c.b16 %v317, %v315
  %v356 = vpack.c.b16 %v318, %v316
  %v357 = vpack.c.b16 %v321, %v319
  %v358 = vpack.c.b16 %v322, %v320
  %v359 = vpack.c.b16 %v325, %v323
  %v360 = vpack.c.b16 %v326, %v324
  %v361 = vpack.c.b16 %v329, %v327
  %v362 = vpack.c.b16 %v330, %v328
  %395 = vmatprep.subr.bf16.mxu0 %v346
  %396 = vmatpush1.bf16.msra.mxu0 %v345
  %397 = vmatprep.subr.bf16.mxu0 %v344
  %398 = vmatpush1.bf16.msra.mxu0 %v343
  %399 = vmatprep.subr.bf16.mxu0 %v342
  %400 = vmatpush1.bf16.msra.mxu0 %v341
  %401 = vmatprep.subr.bf16.mxu0 %v340
  %402 = vmatpush1.bf16.msra.mxu0 %v339
  %403 = vmatprep.subr.bf16.mxu0 %v338
  %404 = vmatpush1.bf16.msra.mxu0 %v337
  %405 = vmatprep.subr.bf16.mxu0 %v336
  %406 = vmatpush1.bf16.msra.mxu0 %v335
  %407 = vmatprep.subr.bf16.mxu0 %v334
  %408 = vmatpush1.bf16.msra.mxu0 %v333
  %409 = vmatprep.subr.bf16.mxu0 %v332
  %410 = vmatpush1.bf16.msra.mxu0 %v331
  %411 = vmatprep.subr.bf16.mxu0 %v362
  %412 = vmatpush2.bf16.msra.mxu0 %v361
  %413 = vmatprep.subr.bf16.mxu0 %v360
  %414 = vmatpush2.bf16.msra.mxu0 %v359
  %415 = vmatprep.subr.bf16.mxu0 %v358
  %416 = vmatpush2.bf16.msra.mxu0 %v357
  %417 = vmatprep.subr.bf16.mxu0 %v356
  %418 = vmatpush2.bf16.msra.mxu0 %v355
  %419 = vmatprep.subr.bf16.mxu0 %v354
  %420 = vmatpush2.bf16.msra.mxu0 %v353
  %421 = vmatprep.subr.bf16.mxu0 %v352
  %422 = vmatpush2.bf16.msra.mxu0 %v351
  %423 = vmatprep.subr.bf16.mxu0 %v350
  %424 = vmatpush2.bf16.msra.mxu0 %v349
  %425 = vmatprep.subr.bf16.mxu0 %v348
  %426 = vmatpush2.bf16.msra.mxu0 %v347
  %427 = vmatprep.mubr.bf16.mxu0 %v190
  %428 = vmatmul.mubr.bf16.gmra.mxu0 %v189
  %v429 = vpop.f32.mrf.mxu0
  %v430 = vadd.f32 %v228, %v429
  %v431 = vpop.f32.mrf.mxu0
  %v432 = vadd.f32 %v232, %v431
  %v433 = vpop.f32.mrf.mxu0
  %v434 = vpop.f32.mrf.mxu0
  %435 = vdwg.mxu0
  %v436 = vmul.f32 %v430, 0.01
  %v437 = vmul.f32 %v432, 0.01
  %v438 = vmax.f32 %v430, %v436
  %v439 = vmax.f32 %v432, %v437
  %v440 = vpack.c.bf16 %v438, %v438
  %v441 = vpack.c.bf16 %v439, %v439
  %v442 = vld [vmem:[%s5] sm:$0xf]
  %v443 = vld [vmem:[%s5 + $0x4] sm:$0xf]
  %v444 = vld [vmem:[%s5 + $0x8] sm:$0xf]
  %v445 = vld [vmem:[%s5 + $0xc] sm:$0xf]
  %v446 = vld [vmem:[%s5 + $0x10] sm:$0xf]
  %v447 = vld [vmem:[%s5 + $0x14] sm:$0xf]
  %v448 = vld [vmem:[%s5 + $0x18] sm:$0xf]
  %v449 = vld [vmem:[%s5 + $0x1c] sm:$0xf]
  %v450 = vld [vmem:[%s5 + $0x20] sm:$0xf]
  %v451 = vld [vmem:[%s5 + $0x24] sm:$0xf]
  %v452 = vld [vmem:[%s5 + $0x28] sm:$0xf]
  %v453 = vld [vmem:[%s5 + $0x2c] sm:$0xf]
  %v454 = vld [vmem:[%s5 + $0x30] sm:$0xf]
  %v455 = vld [vmem:[%s5 + $0x34] sm:$0xf]
  %v456 = vld [vmem:[%s5 + $0x38] sm:$0xf]
  %v457 = vld [vmem:[%s5 + $0x3c] sm:$0xf]
  %v458 = vld [vmem:[%s5 + $0x40] sm:$0xf]
  %v459 = vld [vmem:[%s5 + $0x44] sm:$0xf]
  %v460 = vld [vmem:[%s5 + $0x48] sm:$0xf]
  %v461 = vld [vmem:[%s5 + $0x4c] sm:$0xf]
  %v462 = vld [vmem:[%s5 + $0x50] sm:$0xf]
  %v463 = vld [vmem:[%s5 + $0x54] sm:$0xf]
  %v464 = vld [vmem:[%s5 + $0x58] sm:$0xf]
  %v465 = vld [vmem:[%s5 + $0x5c] sm:$0xf]
  %v466 = vld [vmem:[%s5 + $0x60] sm:$0xf]
  %v467 = vld [vmem:[%s5 + $0x64] sm:$0xf]
  %v468 = vld [vmem:[%s5 + $0x68] sm:$0xf]
  %v469 = vld [vmem:[%s5 + $0x6c] sm:$0xf]
  %v470 = vld [vmem:[%s5 + $0x70] sm:$0xf]
  %v471 = vld [vmem:[%s5 + $0x74] sm:$0xf]
  %v472 = vld [vmem:[%s5 + $0x78] sm:$0xf]
  %v473 = vld [vmem:[%s5 + $0x7c] sm:$0xf]
  %v474 = vld [vmem:[#allocation2] sm:$0x1]
  %v476 = vlaneseq
  %v477 = vshrl.u32 %v476, 7
  %v478 = vsub.s32 0, %v477
  %v479 = vrot.slane %v474, %v478
  %v513 = vunpack.c.l.b16 %v442
  %v514 = vunpack.c.l.b16 %v443
  %v515 = vunpack.c.l.b16 %v444
  %v516 = vunpack.c.l.b16 %v445
  %v517 = vunpack.c.l.b16 %v446
  %v518 = vunpack.c.l.b16 %v447
  %v519 = vunpack.c.l.b16 %v448
  %v520 = vunpack.c.l.b16 %v449
  %v521 = vunpack.c.l.b16 %v450
  %v522 = vunpack.c.l.b16 %v451
  %v523 = vunpack.c.l.b16 %v452
  %v524 = vunpack.c.l.b16 %v453
  %v525 = vunpack.c.l.b16 %v454
  %v526 = vunpack.c.l.b16 %v455
  %v527 = vunpack.c.l.b16 %v456
  %v528 = vunpack.c.l.b16 %v457
  %v529 = vunpack.c.l.b16 %v458
  %v530 = vunpack.c.l.b16 %v459
  %v531 = vunpack.c.l.b16 %v460
  %v532 = vunpack.c.l.b16 %v461
  %v533 = vunpack.c.l.b16 %v462
  %v534 = vunpack.c.l.b16 %v463
  %v535 = vunpack.c.l.b16 %v464
  %v536 = vunpack.c.l.b16 %v465
  %v537 = vunpack.c.l.b16 %v466
  %v538 = vunpack.c.l.b16 %v467
  %v539 = vunpack.c.l.b16 %v468
  %v540 = vunpack.c.l.b16 %v469
  %v541 = vunpack.c.l.b16 %v470
  %v542 = vunpack.c.l.b16 %v471
  %v543 = vunpack.c.l.b16 %v472
  %v544 = vunpack.c.l.b16 %v473
  %v545 = vpack.c.b16 %v514, %v513
  %v546 = vpack.c.b16 %v516, %v515
  %v547 = vpack.c.b16 %v518, %v517
  %v548 = vpack.c.b16 %v520, %v519
  %v549 = vpack.c.b16 %v522, %v521
  %v550 = vpack.c.b16 %v524, %v523
  %v551 = vpack.c.b16 %v526, %v525
  %v552 = vpack.c.b16 %v528, %v527
  %v553 = vpack.c.b16 %v530, %v529
  %v554 = vpack.c.b16 %v532, %v531
  %v555 = vpack.c.b16 %v534, %v533
  %v556 = vpack.c.b16 %v536, %v535
  %v557 = vpack.c.b16 %v538, %v537
  %v558 = vpack.c.b16 %v540, %v539
  %v559 = vpack.c.b16 %v542, %v541
  %v560 = vpack.c.b16 %v544, %v543
  %577 = vmatprep.subr.bf16.mxu0 0
  %578 = vmatpush1.bf16.msra.mxu0 %v552
  %579 = vmatprep.subr.bf16.mxu0 0
  %580 = vmatpush1.bf16.msra.mxu0 %v551
  %581 = vmatprep.subr.bf16.mxu0 0
  %582 = vmatpush1.bf16.msra.mxu0 %v550
  %583 = vmatprep.subr.bf16.mxu0 0
  %584 = vmatpush1.bf16.msra.mxu0 %v549
  %585 = vmatprep.subr.bf16.mxu0 0
  %586 = vmatpush1.bf16.msra.mxu0 %v548
  %587 = vmatprep.subr.bf16.mxu0 0
  %588 = vmatpush1.bf16.msra.mxu0 %v547
  %589 = vmatprep.subr.bf16.mxu0 0
  %590 = vmatpush1.bf16.msra.mxu0 %v546
  %591 = vmatprep.subr.bf16.mxu0 0
  %592 = vmatpush1.bf16.msra.mxu0 %v545
  %593 = vmatprep.subr.bf16.mxu0 0
  %594 = vmatpush2.bf16.msra.mxu0 %v560
  %595 = vmatprep.subr.bf16.mxu0 0
  %596 = vmatpush2.bf16.msra.mxu0 %v559
  %597 = vmatprep.subr.bf16.mxu0 0
  %598 = vmatpush2.bf16.msra.mxu0 %v558
  %599 = vmatprep.subr.bf16.mxu0 0
  %600 = vmatpush2.bf16.msra.mxu0 %v557
  %601 = vmatprep.subr.bf16.mxu0 0
  %602 = vmatpush2.bf16.msra.mxu0 %v556
  %603 = vmatprep.subr.bf16.mxu0 0
  %604 = vmatpush2.bf16.msra.mxu0 %v555
  %605 = vmatprep.subr.bf16.mxu0 0
  %606 = vmatpush2.bf16.msra.mxu0 %v554
  %607 = vmatprep.subr.bf16.mxu0 0
  %608 = vmatpush2.bf16.msra.mxu0 %v553
  %609 = vmatprep.mubr.bf16.mxu0 %v441
  %610 = vmatmul.mubr.bf16.gmra.mxu0 %v440
  %v611 = vpop.f32.mrf.mxu0
  %v612 = vadd.f32 %v479, %v611
  %v613 = vpop.f32.mrf.mxu0
  %v614 = vpop.f32.mrf.mxu0
  %v615 = vpop.f32.mrf.mxu0
  %616 = vdwg.mxu0
  %v617 = vxor.u32 %v612, 2147483648
  %v618 = vmul.f32 %v617, 1.442695
  %v619 = vpow.pop %v618
  %v620 = vadd.f32 %v619, 1.0
  %v621 = vrcp.pop %v620
  %v622 = vmul.f32 1.0, %v621
  %vm623 = vcmask 7168
  %624 = vst.msk [vmem:[%s7] sm:$0xff] %vm623, %v622
  // Predicated region
  $region30: #{mlp_forward.1} parent=0 // pred_check
    _
  $region31: #{mlp_forward.1} parent=0 // pred_check_branch
    %626 = sbr.rel (0) target = $region33
  $region32: #{mlp_forward.1} parent=0 // pred_region
    _
  $region33: #{mlp_forward.1} parent=0 // pred_fallthru
    _
  // Predicated region
  $region34: #{mlp_forward.1} parent=0 // pred_check
    _
  $region35: #{mlp_forward.1} parent=0 // pred_check_branch
    %628 = sbr.rel (0) target = $region37
  $region36: #{mlp_forward.1} parent=0 // pred_region
    _
  $region37: #{mlp_forward.1} parent=0 // pred_fallthru
    _

</llo_original>
